<compile_context>
chip_gen: v5e
topology: v5e:2x2
jax: 0.10.0
libtpu: 0.0.40
codegen_flags: <defaults>
</compile_context>

<pallas_src>
import functools

import jax
import jax.numpy as jnp
from jax.experimental import pallas as pl
from jax.experimental.pallas import tpu as pltpu


def _label_smoothing_kernel(x_ref, t_ref, loss_ref, loss_acc, cnt_acc, *,
                            confidence, smoothing, ignore_index):
    step = pl.program_id(0)

    @pl.when(step == 0)
    def _init():
        loss_acc[...] = jnp.zeros_like(loss_acc)
        cnt_acc[...] = jnp.zeros_like(cnt_acc)

    x = x_ref[...].astype(jnp.float32)        # (TM, V) logits tile
    tgt = t_ref[...]                          # (TM, 1) int32 targets

    # Numerically stable log-softmax along the vocab (lane) axis.
    row_max = jnp.max(x, axis=-1, keepdims=True)
    z = x - row_max
    lse = jnp.log(jnp.sum(jnp.exp(z), axis=-1, keepdims=True))
    pred = z - lse                            # (TM, V) log-probs

    # Vectorized construction of the smoothed target distribution
    # (replaces torch scatter_ + masked_fill_).
    col = jax.lax.broadcasted_iota(jnp.int32, x.shape, dimension=1)
    model_prob = jnp.where(col == tgt, confidence, smoothing)
    model_prob = jnp.where(col == ignore_index, 0.0, model_prob)
    model_prob = jnp.where(tgt == ignore_index, 0.0, model_prob)

    row_loss = -jnp.sum(pred * model_prob, axis=-1, keepdims=True)  # (TM, 1)
    valid = (tgt != ignore_index).astype(jnp.float32)               # (TM, 1)

    loss_acc[...] += jnp.sum(row_loss, keepdims=True)
    cnt_acc[...] += jnp.sum(valid, keepdims=True)

    @pl.when(step == pl.num_programs(0) - 1)
    def _finalize():
        loss_ref[...] = (loss_acc[...] / cnt_acc[...]).astype(loss_ref.dtype)


def label_smoothing_loss(output, target, *, label_smoothing, tgt_vocab_size,
                         ignore_index=0, block_rows=None):
    """output: (B, S, V) float logits; target: (B, S) int labels. Returns scalar."""
    assert 0.0 < label_smoothing <= 1.0
    B, S = target.shape
    V = output.shape[-1]
    M = B * S

    x = output.reshape(M, V).astype(jnp.float32)
    t = target.reshape(M).astype(jnp.int32)

    confidence = 1.0 - label_smoothing
    smoothing = label_smoothing / (tgt_vocab_size - 2)

    if block_rows is None:
        # ~4 MiB per activation tile; Pallas double-buffers it, keeping total
        # VMEM use well under the scoped limit on v5e/v6e and v7x's 64 MiB.
        block_rows = min(1024, max(8, (4 * 1024 * 1024) // (V * 4)))
    tm = max(8, (block_rows // 8) * 8)
    tm = min(tm, ((M + 7) // 8) * 8)          # no point tiling past the data

    m_pad = ((M + tm - 1) // tm) * tm
    if m_pad != M:
        # Padded rows are tagged ignore_index -> contribute nothing.
        x = jnp.pad(x, ((0, m_pad - M), (0, 0)))
        t = jnp.pad(t, (0, m_pad - M), constant_values=ignore_index)
    t2 = t.reshape(m_pad, 1)

    kernel = functools.partial(
        _label_smoothing_kernel,
        confidence=confidence, smoothing=smoothing, ignore_index=ignore_index)

    loss = pl.pallas_call(
        kernel,
        out_shape=jax.ShapeDtypeStruct((1, 1), jnp.float32),
        grid=(m_pad // tm,),
        in_specs=[pl.BlockSpec((tm, V), lambda i: (i, 0)),
                  pl.BlockSpec((tm, 1), lambda i: (i, 0))],
        out_specs=pl.BlockSpec((1, 1), lambda i: (0, 0)),
        scratch_shapes=[pltpu.VMEM((1, 1), jnp.float32),   # running loss sum
                        pltpu.VMEM((1, 1), jnp.float32)],  # running valid count
        compiler_params=pltpu.CompilerParams(
            dimension_semantics=("arbitrary",),            # reduction axis
            vmem_limit_bytes=32 * 1024 * 1024),
    )(x, t2)
    return loss[0, 0]


def _reference(output, target, label_smoothing, tgt_vocab_size, ignore_index=0):
    """Pure-JAX reproduction of the PyTorch forward."""
    B, S = target.shape
    V = output.shape[-1]
    M = B * S
    x = output.reshape(M, V)
    t = target.reshape(M)

    smoothing_value = label_smoothing / (tgt_vocab_size - 2)
    confidence = 1.0 - label_smoothing

    one_hot = jnp.full((V,), smoothing_value, dtype=jnp.float32)
    one_hot = one_hot.at[ignore_index].set(0.0)
    model_prob = jnp.tile(one_hot[None, :], (M, 1))
    model_prob = model_prob.at[jnp.arange(M), t].set(confidence)
    model_prob = jnp.where((t == ignore_index)[:, None], 0.0, model_prob)

    pred = jax.nn.log_softmax(x.astype(jnp.float32), axis=-1)
    return jnp.sum(-pred * model_prob) / jnp.sum(t != ignore_index)


if __name__ == "__main__":
    B, S, V = 2, 8, 32
    label_smoothing = 0.1
    ignore_index = 0

    key = jax.random.PRNGKey(0)
    k_out, k_tgt = jax.random.split(key)
    output = jax.random.normal(k_out, (B, S, V), dtype=jnp.float32)
    target = jax.random.randint(k_tgt, (B, S), 0, V, dtype=jnp.int32)
    # Ensure some ignored positions exist to exercise the masking path.
    target = target.at[0, 0].set(ignore_index)
    target = target.at[1, 3].set(ignore_index)

    # block_rows=8 -> 2 grid steps at these shapes, exercising the accumulator.
    loss = label_smoothing_loss(output, target,
                                label_smoothing=label_smoothing,
                                tgt_vocab_size=V,
                                ignore_index=ignore_index,
                                block_rows=8)
    loss = jax.block_until_ready(loss)

    ref = _reference(output, target, label_smoothing, V, ignore_index)
    assert jnp.isfinite(loss), loss
    assert jnp.allclose(loss, ref, atol=1e-5, rtol=1e-5), (loss, ref)
    print("KERNEL_OK")
</pallas_src>

<mosaic_0001>
module attributes {stable_mosaic.version = 11 : i64} {
  func.func @_label_smoothing_kernel(%arg0: i32, %arg1: memref<8x32xf32, #tpu.memory_space<vmem>>, %arg2: memref<8x1xi32, #tpu.memory_space<vmem>>, %arg3: memref<1x1xf32, #tpu.memory_space<vmem>>, %arg4: memref<1x1xf32, #tpu.memory_space<vmem>>, %arg5: memref<1x1xf32, #tpu.memory_space<vmem>>) attributes {dimension_semantics = [#tpu.dimension_semantics<arbitrary>], iteration_bounds = array<i64: 2>, scalar_prefetch = 0 : i64, scratch_operands = 2 : i64, tpu.core_type = #tpu.core_type<tc>, window_params = [{transform_indices = @transform_0, window_bounds = array<i64: 8, 32>}, {transform_indices = @transform_1, window_bounds = array<i64: 8, 1>}, {pipeline_mode = #tpu.pipeline_mode<synchronous>, transform_indices = @transform_2, window_bounds = array<i64: 1, 1>}]} {
    %c0_i32 = arith.constant 0 : i32
    %0 = arith.cmpi eq, %arg0, %c0_i32 : i32
    %1 = arith.extui %0 : i1 to i32
    %c0_i32_0 = arith.constant 0 : i32
    %2 = arith.cmpi ne, %1, %c0_i32_0 : i32
    scf.if %2 {
      %cst_25 = arith.constant 0.000000e+00 : f32
      %59 = vector.broadcast %cst_25 : f32 to vector<1x1xf32>
      %c0_26 = arith.constant 0 : index
      %c0_27 = arith.constant 0 : index
      %60 = vector.load %arg4[%c0_26, %c0_27] : memref<1x1xf32, #tpu.memory_space<vmem>>, vector<1x1xf32>
      tpu.vector_store %arg4[%c0_26, %c0_27], %59 {strides = array<i32>} : memref<1x1xf32, #tpu.memory_space<vmem>>, vector<1x1xf32>,
      %cst_28 = arith.constant 0.000000e+00 : f32
      %61 = vector.broadcast %cst_28 : f32 to vector<1x1xf32>
      %c0_29 = arith.constant 0 : index
      %c0_30 = arith.constant 0 : index
      %62 = vector.load %arg5[%c0_29, %c0_30] : memref<1x1xf32, #tpu.memory_space<vmem>>, vector<1x1xf32>
      tpu.vector_store %arg5[%c0_29, %c0_30], %61 {strides = array<i32>} : memref<1x1xf32, #tpu.memory_space<vmem>>, vector<1x1xf32>,
    } else {
    }
    %c0 = arith.constant 0 : index
    %c0_1 = arith.constant 0 : index
    %3 = vector.load %arg1[%c0, %c0_1] : memref<8x32xf32, #tpu.memory_space<vmem>>, vector<8x32xf32>
    %c0_2 = arith.constant 0 : index
    %c0_3 = arith.constant 0 : index
    %4 = vector.load %arg2[%c0_2, %c0_3] : memref<8x1xi32, #tpu.memory_space<vmem>>, vector<8x1xi32>
    %cst = arith.constant dense<0xFF800000> : vector<8xf32>
    %5 = vector.multi_reduction <maximumf>, %3, %cst [1] : vector<8x32xf32> to vector<8xf32>
    %6 = vector.shape_cast %5 : vector<8xf32> to vector<8x1xf32>
    %7 = vector.broadcast %6 : vector<8x1xf32> to vector<8x32xf32>
    %8 = arith.subf %3, %7 : vector<8x32xf32>
    %9 = math.exp %8 : vector<8x32xf32>
    %cst_4 = arith.constant dense<0.000000e+00> : vector<8xf32>
    %10 = vector.multi_reduction <add>, %9, %cst_4 [1] : vector<8x32xf32> to vector<8xf32>
    %11 = vector.shape_cast %10 : vector<8xf32> to vector<8x1xf32>
    %12 = math.log %11 : vector<8x1xf32>
    %13 = vector.broadcast %12 : vector<8x1xf32> to vector<8x32xf32>
    %14 = arith.subf %8, %13 : vector<8x32xf32>
    %15 = tpu.iota {dimensions = array<i32: 1>} : vector<8x32xi32>
    %16 = vector.broadcast %4 : vector<8x1xi32> to vector<8x32xi32>
    %17 = arith.cmpi eq, %15, %16 : vector<8x32xi32>
    %cst_5 = arith.constant 0.899999976 : f32
    %cst_6 = arith.constant 0.00333333341 : f32
    %18 = vector.broadcast %cst_5 : f32 to vector<8x32xf32>
    %19 = vector.broadcast %cst_6 : f32 to vector<8x32xf32>
    %20 = arith.select %17, %18, %19 : vector<8x32xi1>, vector<8x32xf32>
    %c0_i32_7 = arith.constant 0 : i32
    %21 = vector.broadcast %c0_i32_7 : i32 to vector<8x32xi32>
    %22 = arith.cmpi eq, %15, %21 : vector<8x32xi32>
    %cst_8 = arith.constant 0.000000e+00 : f32
    %23 = vector.broadcast %cst_8 : f32 to vector<8x32xf32>
    %24 = arith.select %22, %23, %20 : vector<8x32xi1>, vector<8x32xf32>
    %c0_i32_9 = arith.constant 0 : i32
    %25 = vector.broadcast %c0_i32_9 : i32 to vector<8x1xi32>
    %26 = arith.cmpi eq, %4, %25 : vector<8x1xi32>
    %cst_10 = arith.constant 0.000000e+00 : f32
    %27 = vector.shape_cast %26 : vector<8x1xi1> to vector<8x1xi1>
    %28 = vector.broadcast %27 : vector<8x1xi1> to vector<8x32xi1>
    %29 = vector.broadcast %cst_10 : f32 to vector<8x32xf32>
    %30 = arith.select %28, %29, %24 : vector<8x32xi1>, vector<8x32xf32>
    %31 = arith.mulf %14, %30 : vector<8x32xf32>
    %cst_11 = arith.constant dense<0.000000e+00> : vector<8xf32>
    %32 = vector.multi_reduction <add>, %31, %cst_11 [1] : vector<8x32xf32> to vector<8xf32>
    %33 = vector.shape_cast %32 : vector<8xf32> to vector<8x1xf32>
    %cst_12 = arith.constant 0.000000e+00 : f32
    %34 = vector.broadcast %cst_12 : f32 to vector<8x1xf32>
    %35 = arith.subf %34, %33 : vector<8x1xf32>
    %c0_i32_13 = arith.constant 0 : i32
    %36 = vector.broadcast %c0_i32_13 : i32 to vector<8x1xi32>
    %37 = arith.cmpi ne, %4, %36 : vector<8x1xi32>
    %38 = arith.extui %37 : vector<8x1xi1> to vector<8x1xi32>
    %39 = arith.sitofp %38 : vector<8x1xi32> to vector<8x1xf32>
    %c0_14 = arith.constant 0 : index
    %c0_15 = arith.constant 0 : index
    %40 = vector.load %arg4[%c0_14, %c0_15] : memref<1x1xf32, #tpu.memory_space<vmem>>, vector<1x1xf32>
    %41 = vector.shape_cast %35 : vector<8x1xf32> to vector<1x8x1xf32>
    %cst_16 = arith.constant dense<0.000000e+00> : vector<1xf32>
    %42 = vector.multi_reduction <add>, %41, %cst_16 [1, 2] : vector<1x8x1xf32> to vector<1xf32>
    %43 = vector.shape_cast %42 : vector<1xf32> to vector<1x1x1xf32>
    %44 = vector.extract %43[0, 0, 0] : f32 from vector<1x1x1xf32>
    %45 = vector.broadcast %44 : f32 to vector<1x1xf32>
    %46 = arith.addf %40, %45 : vector<1x1xf32>
    %c0_17 = arith.constant 0 : index
    %c0_18 = arith.constant 0 : index
    %47 = vector.load %arg4[%c0_17, %c0_18] : memref<1x1xf32, #tpu.memory_space<vmem>>, vector<1x1xf32>
    tpu.vector_store %arg4[%c0_17, %c0_18], %46 {strides = array<i32>} : memref<1x1xf32, #tpu.memory_space<vmem>>, vector<1x1xf32>,
    %c0_19 = arith.constant 0 : index
    %c0_20 = arith.constant 0 : index
    %48 = vector.load %arg5[%c0_19, %c0_20] : memref<1x1xf32, #tpu.memory_space<vmem>>, vector<1x1xf32>
    %49 = vector.shape_cast %39 : vector<8x1xf32> to vector<1x8x1xf32>
    %cst_21 = arith.constant dense<0.000000e+00> : vector<1xf32>
    %50 = vector.multi_reduction <add>, %49, %cst_21 [1, 2] : vector<1x8x1xf32> to vector<1xf32>
    %51 = vector.shape_cast %50 : vector<1xf32> to vector<1x1x1xf32>
    %52 = vector.extract %51[0, 0, 0] : f32 from vector<1x1x1xf32>
    %53 = vector.broadcast %52 : f32 to vector<1x1xf32>
    %54 = arith.addf %48, %53 : vector<1x1xf32>
    %c0_22 = arith.constant 0 : index
    %c0_23 = arith.constant 0 : index
    %55 = vector.load %arg5[%c0_22, %c0_23] : memref<1x1xf32, #tpu.memory_space<vmem>>, vector<1x1xf32>
    tpu.vector_store %arg5[%c0_22, %c0_23], %54 {strides = array<i32>} : memref<1x1xf32, #tpu.memory_space<vmem>>, vector<1x1xf32>,
    %c1_i32 = arith.constant 1 : i32
    %56 = arith.cmpi eq, %arg0, %c1_i32 : i32
    %57 = arith.extui %56 : i1 to i32
    %c0_i32_24 = arith.constant 0 : i32
    %58 = arith.cmpi ne, %57, %c0_i32_24 : i32
    scf.if %58 {
      %c0_25 = arith.constant 0 : index
      %c0_26 = arith.constant 0 : index
      %59 = vector.load %arg4[%c0_25, %c0_26] : memref<1x1xf32, #tpu.memory_space<vmem>>, vector<1x1xf32>
      %c0_27 = arith.constant 0 : index
      %c0_28 = arith.constant 0 : index
      %60 = vector.load %arg5[%c0_27, %c0_28] : memref<1x1xf32, #tpu.memory_space<vmem>>, vector<1x1xf32>
      %61 = arith.divf %59, %60 : vector<1x1xf32>
      %c0_29 = arith.constant 0 : index
      %c0_30 = arith.constant 0 : index
      %62 = vector.load %arg3[%c0_29, %c0_30] : memref<1x1xf32, #tpu.memory_space<vmem>>, vector<1x1xf32>
      tpu.vector_store %arg3[%c0_29, %c0_30], %61 {strides = array<i32>} : memref<1x1xf32, #tpu.memory_space<vmem>>, vector<1x1xf32>,
    } else {
    }
    return
  }
  func.func @transform_0(%arg0: i32) -> (i32, i32) {
    %c0_i32 = arith.constant 0 : i32
    %c0_i32_0 = arith.constant 0 : i32
    return %arg0, %c0_i32 : i32, i32
  }
  func.func @transform_1(%arg0: i32) -> (i32, i32) {
    %c0_i32 = arith.constant 0 : i32
    %c0_i32_0 = arith.constant 0 : i32
    return %arg0, %c0_i32 : i32, i32
  }
  func.func @transform_2(%arg0: i32) -> (i32, i32) {
    %c0_i32 = arith.constant 0 : i32
    %c0_i32_0 = arith.constant 0 : i32
    %c0_i32_1 = arith.constant 0 : i32
    return %c0_i32, %c0_i32_0 : i32, i32
  }
}

</mosaic_0001>

<llo_original>
// kernel: tpu_custom_call.1
$region0: #{tpu_custom_call.1}
  #allocation0 [shape = 'u32[]', space=smem, size = 0x4, offset = 0x4, fixed_abs, tag = 'smem constant byte address 0x4 - core index']
  #allocation1 [shape = 'u32[72,128]{1,0:T(1,128)}', space=vmem, size = 0x9000, scoped, tag = 'internal scratch']
  #allocation2 [shape = 'f32[1,1]{1,0:T(1,128)}', space=vmem, size = 0x200, scoped, tag = 'scratch operand']
  #allocation3 [shape = 'f32[1,1]{1,0:T(1,128)}', space=vmem, size = 0x200, scoped, tag = 'scratch operand']
  %s0 = inlined_call_operand.vmem [shape: f32[16,32], index: 0, kind: input, shape index: {}]
  %s1 = inlined_call_operand.vmem [shape: s32[16,1], index: 1, kind: input, shape index: {}]
  %s2 = inlined_call_operand.hbm [shape: f32[1,1], index: 2, kind: output, shape index: {}]
  %s3 = sld [smem:[#allocation0]]
  $region49: #{tpu_custom_call.1} parent=0
    _
  %s5 = ssub.s32 1, %s3
  %s6 = scalar_select 0, %s5, %s3
  $region1: #{tpu_custom_call.1} parent=0
    #allocation4 [shape = 'u8[512]{0}', space=vmem, size = 0x400, scoped, tag = 'output window, operand 0, single buffered']
    #allocation5 [shape = 's32[2]{0}', space=sflag, size = 0x8, scoped, tag = 'scoped memory for tpu_custom_call.1']
    %7 = vsyncpa [#allocation5], 0
    loop: start=0, step=1, limit=4
    $region2: #{tpu_custom_call.1} parent=1 // loop_pre_header
      _
    $region3: #{tpu_custom_call.1} parent=1 // loop_header
      %s9 = sphi 0, %s13
      %p10 = scmp.ge.s32.totalorder %s9, 4
      %s19 = sphi 0, %s21
      %s22 = sphi 0, %s19
      %s23 = sphi 0, %s22
      %s39 = sphi 0, %s23
      %s45 = sphi 0, %s47
      %s48 = sphi 0, %s45
      %s49 = sphi 0, %s48
      %s65 = sphi 0, %s49
      %s69 = sphi 0, %s69
      %s71 = sphi 0, %s69
      %s72 = sphi 0, %s71
      %s86 = sphi 0, %s72
    $region4: #{tpu_custom_call.1} parent=1 // loop_header_branch
      %12 = sbr.rel (%p10) target = $region8
    $region5: #{tpu_custom_call.1} parent=1 // loop_body
      %s14 = ssub.s32 %s9, 1
      %s15 = ssub.s32 %s9, 2
      %s16 = sadd.s32 %s9, 1
      %s17 = ssub.s32 %s9, %s16
      %p18 = scmp.eq.s32.totalorder %s17, 0
      %s20 = sadd.s32 %s19, 1
      %s21 = scalar_select %p18, %s19, %s20
      %p24 = pneg %p18
      %p25 = scmp.eq.s32.totalorder %s9, 1
      %p26 = por %p24, %p25
      %p27 = scmp.ne.s32.totalorder %s19, %s22
      %p28 = scmp.eq.s32.totalorder %s9, 0
      %p29 = por %p27, %p28
      %p30 = scmp.ne.s32.totalorder %s19, %s22
      %p31 = scmp.eq.s32.totalorder %s14, 1
      %p32 = por %p30, %p31
      %p33 = scmp.ne.s32.totalorder %s22, %s23
      %p34 = scmp.eq.s32.totalorder %s14, 0
      %p35 = por %p33, %p34
      %p36 = scmp.ne.s32.totalorder %s22, %s23
      %p37 = scmp.eq.s32.totalorder %s15, 1
      %p38 = por %p36, %p37
      %p40 = scmp.ne.s32.totalorder %s23, %s39
      %p41 = scmp.eq.s32.totalorder %s15, 0
      %p42 = por %p40, %p41
      %s43 = ssub.s32 %s9, %s16
      %p44 = scmp.eq.s32.totalorder %s43, 0
      %s46 = sadd.s32 %s45, 1
      %s47 = scalar_select %p44, %s45, %s46
      %p50 = pneg %p44
      %p51 = scmp.eq.s32.totalorder %s9, 1
      %p52 = por %p50, %p51
      %p53 = scmp.ne.s32.totalorder %s45, %s48
      %p54 = scmp.eq.s32.totalorder %s9, 0
      %p55 = por %p53, %p54
      %p56 = scmp.ne.s32.totalorder %s45, %s48
      %p57 = scmp.eq.s32.totalorder %s14, 1
      %p58 = por %p56, %p57
      %p59 = scmp.ne.s32.totalorder %s48, %s49
      %p60 = scmp.eq.s32.totalorder %s14, 0
      %p61 = por %p59, %p60
      %p62 = scmp.ne.s32.totalorder %s48, %s49
      %p63 = scmp.eq.s32.totalorder %s15, 1
      %p64 = por %p62, %p63
      %p66 = scmp.ne.s32.totalorder %s49, %s65
      %p67 = scmp.eq.s32.totalorder %s15, 0
      %p68 = por %p66, %p67
      %s70 = sadd.s32 %s69, 1
      %p73 = scmp.eq.s32.totalorder %s9, 1
      %p74 = scmp.ne.s32.totalorder %s69, %s71
      %p75 = scmp.eq.s32.totalorder %s9, 0
      %p76 = por %p74, %p75
      %p77 = scmp.ne.s32.totalorder %s69, %s71
      %p78 = scmp.eq.s32.totalorder %s14, 1
      %p79 = por %p77, %p78
      %p80 = scmp.ne.s32.totalorder %s71, %s72
      %p81 = scmp.eq.s32.totalorder %s14, 0
      %p82 = por %p80, %p81
      %p83 = scmp.ne.s32.totalorder %s71, %s72
      %p84 = scmp.eq.s32.totalorder %s15, 1
      %p85 = por %p83, %p84
      %p87 = scmp.ne.s32.totalorder %s72, %s86
      %p88 = scmp.eq.s32.totalorder %s15, 0
      %p89 = por %p87, %p88
      %p90 = scmp.le.s32.totalorder 1, %s9
      %p91 = scmp.lt.s32.totalorder %s9, 3
      %p92 = pnand %p90, %p91
      %p93 = pneg %p92
      // Predicated region
      $region9: #{tpu_custom_call.1} parent=5 // pred_check
        _
      $region10: #{tpu_custom_call.1} parent=5 // pred_check_branch
        %95 = sbr.rel (%p92) target = $region12
      $region11: #{tpu_custom_call.1} parent=5 // pred_region
        %s96 = ssub.s32 %s9, 1
      $region12: #{tpu_custom_call.1} parent=5 // pred_fallthru
        _
      %p97 = scmp.lt.s32.totalorder %s9, 2
      // Predicated region
      $region13: #{tpu_custom_call.1} parent=5 // pred_check
        %p98 = pneg %p97
      $region14: #{tpu_custom_call.1} parent=5 // pred_check_branch
        %100 = sbr.rel (%p98) target = $region16
      $region15: #{tpu_custom_call.1} parent=5 // pred_region
        // Predicated region
        $region17: #{tpu_custom_call.1} parent=15 // pred_check
          %p101 = pneg %p29
        $region18: #{tpu_custom_call.1} parent=15 // pred_check_branch
          %103 = sbr.rel (%p101) target = $region20
        $region19: #{tpu_custom_call.1} parent=15 // pred_region
          %p104 = scmp.lt.s32.totalorder %s9, 1
          %s105 = scalar_select %p104, %s9, 1
          %s106 = smul.addr %s105, 8
          %s107 = scalar_lea.vmem %s0, %s106
        $region20: #{tpu_custom_call.1} parent=15 // pred_fallthru
          _
        // Predicated region
        $region21: #{tpu_custom_call.1} parent=15 // pred_check
          %p108 = pneg %p55
        $region22: #{tpu_custom_call.1} parent=15 // pred_check_branch
          %110 = sbr.rel (%p108) target = $region24
        $region23: #{tpu_custom_call.1} parent=15 // pred_region
          %p111 = scmp.lt.s32.totalorder %s9, 1
          %s112 = scalar_select %p111, %s9, 1
          %s113 = smul.addr %s112, 8
          %s114 = scalar_lea.vmem %s1, %s113
        $region24: #{tpu_custom_call.1} parent=15 // pred_fallthru
          _
      $region16: #{tpu_custom_call.1} parent=5 // pred_fallthru
        _
      %p115 = scmp.le.s32.totalorder 1, %s9
      %p116 = scmp.lt.s32.totalorder %s9, 3
      %p117 = pnand %p115, %p116
      %p118 = pneg %p117
      // Predicated region
      $region25: #{tpu_custom_call.1} parent=5 // pred_check
        _
      $region26: #{tpu_custom_call.1} parent=5 // pred_check_branch
        %120 = sbr.rel (%p117) target = $region28
      $region27: #{tpu_custom_call.1} parent=5 // pred_region
        %s121 = ssub.s32 %s9, 1
        %p122 = scmp.lt.s32.totalorder %s14, 1
        %s123 = scalar_select %p122, %s14, 1
        %s124 = smul.addr %s123, 8
        %s125 = scalar_lea.vmem %s0, %s124
        %p126 = pneg %p35
        %p127 = pneg %p32
        %p128 = scmp.lt.s32.totalorder %s14, 1
        %s129 = scalar_select %p128, %s14, 1
        %s130 = smul.addr %s129, 8
        %s131 = scalar_lea.vmem %s1, %s130
        %p132 = pneg %p61
        %p133 = pneg %p58
        %p134 = pneg %p82
        %p135 = pneg %p79
        %p136 = scmp.lt.s32.totalorder %s14, 1
        %s137 = scalar_select %p136, %s14, 1
        %s138 = smul.addr %s137, 8
        %s139 = scalar_lea.vmem %s0, %s138
        %p140 = scmp.lt.s32.totalorder %s14, 1
        %s141 = scalar_select %p140, %s14, 1
        %s142 = smul.addr %s141, 8
        %s143 = scalar_lea.vmem %s1, %s142
        %p144 = scmp.eq.s32.totalorder %s14, 0
        // Predicated region
        $region29: #{tpu_custom_call.1} parent=27 // pred_check
          %p145 = pneg %p144
        $region30: #{tpu_custom_call.1} parent=27 // pred_check_branch
          %147 = sbr.rel (%p145) target = $region32
        $region31: #{tpu_custom_call.1} parent=27 // pred_region
          %vm148 = vcmask 0
          %149 = vst.msk [vmem:[#allocation2] sm:$0x1] %vm148, 0.0
          %150 = vst.msk [vmem:[#allocation3] sm:$0x1] %vm148, 0.0
        $region32: #{tpu_custom_call.1} parent=27 // pred_fallthru
          _
        %v151 = vld [vmem:[%s139] sm:$0xff]
        %v152 = vld [vmem:[%s143] sm:$0xff]
        %vm153 = vcmask 261120
        %v154 = vsel %vm153, %v151, -inf
        %155 = vmax.xlane.f32.xlu0 %v154
        %v156 = vpop.xlane.xlu0 %155
        %v157 = vsub.f32 %v151, %v156
        %v158 = vmul.f32 %v157, 1.442695
        %v159 = vpow.pop %v158
        %v160 = vsel %vm153, %v159, 0.0
        %161 = vadd.xlane.f32.xlu0 %v160
        %v162 = vpop.xlane.xlu0 %161
        %v163 = vlog2.pop %v162
        %v164 = vmul.f32 %v163, 0.6931472
        %v165 = vsub.f32 %v157, %v164
        %v166 = vlaneseq
        %v167 = vand.u32 %v166, 127
        %168 = vset.pattern.permute.xlu0 0
        %169 = vperm.xlu0 %168, %v152
        %v170 = vpop.permute.xlu0 %169
        %vm171 = vcmp.eq.s32.totalorder %v167, %v170
        %v172 = vsel %vm171, 0.9, 0.0033333334
        %vm173 = vcmp.eq.s32.totalorder %v167, 0
        %v174 = vsel %vm173, 0.0, %v172
        %vm175 = vcmp.eq.s32.totalorder %v152, 0
        %v176 = vsel %vm175, 1, 0
        %177 = vset.pattern.permute.xlu0 0
        %178 = vperm.xlu0 %177, %v176
        %v179 = vpop.permute.xlu0 %178
        %vm180 = vcmp.eq.s32.totalorder %v179, 1
        %v181 = vsel %vm180, 0.0, %v174
        %v182 = vmul.f32 %v165, %v181
        %v183 = vsel %vm153, %v182, 0.0
        %184 = vadd.xlane.f32.xlu0 %v183
        %v185 = vpop.xlane.xlu0 %184
        %v186 = vsub.f32 0.0, %v185
        %vm187 = vcmp.ne.s32.totalorder %v152, 0
        %v188 = vsel %vm187, 1, 0
        %v189 = vcvt.s32.f32 %v188
        %v190 = vld [vmem:[#allocation2] sm:$0x1]
        %vm191 = vcmask 7168
        %v192 = vsel %vm191, %v186, 0.0
        %193 = vadd.xlane.f32.xlu0 %v192
        %v194 = vpop.xlane.xlu0 %193
        %v195 = vrot.slane %v194, 4
        %v196 = vadd.f32 %v194, %v195
        %v197 = vrot.slane %v196, 2
        %v198 = vadd.f32 %v196, %v197
        %v199 = vrot.slane %v198, 1
        %v200 = vadd.f32 %v198, %v199
        %s201 = vtos %v200
        %v202 = vstv %s201
        %v203 = vadd.f32 %v190, %v202
        %vm204 = vcmask 0
        %205 = vst.msk [vmem:[#allocation2] sm:$0x1] %vm204, %v203
        %v206 = vld [vmem:[#allocation3] sm:$0x1]
        %v207 = vsel %vm191, %v189, 0.0
        %208 = vadd.xlane.f32.xlu0 %v207
        %v209 = vpop.xlane.xlu0 %208
        %v210 = vrot.slane %v209, 4
        %v211 = vadd.f32 %v209, %v210
        %v212 = vrot.slane %v211, 2
        %v213 = vadd.f32 %v211, %v212
        %v214 = vrot.slane %v213, 1
        %v215 = vadd.f32 %v213, %v214
        %s216 = vtos %v215
        %v217 = vstv %s216
        %v218 = vadd.f32 %v206, %v217
        %219 = vst.msk [vmem:[#allocation3] sm:$0x1] %vm204, %v218
        %p220 = scmp.eq.s32.totalorder %s14, 1
        // Predicated region
        $region33: #{tpu_custom_call.1} parent=27 // pred_check
          %p221 = pneg %p220
        $region34: #{tpu_custom_call.1} parent=27 // pred_check_branch
          %223 = sbr.rel (%p221) target = $region36
        $region35: #{tpu_custom_call.1} parent=27 // pred_region
          %v224 = vld [vmem:[#allocation2] sm:$0x1]
          %v225 = vld [vmem:[#allocation3] sm:$0x1]
          %v226 = vrcp.pop %v225
          %v227 = vmul.f32 %v225, %v226
          %v228 = vsub.f32 1.0, %v227
          %v229 = vmul.f32 %v226, %v228
          %v230 = vadd.f32 %v226, %v229
          %vm231 = vweird.f32 %v225
          %vm232 = vweird.f32 %v226
          %vm233 = vmor %vm231, %vm232
          %v234 = vsel %vm233, %v226, %v230
          %v235 = vand.u32 2147483647, %v225
          %vm236 = vcmp.eq.f32.partialorder %v235, 8.507059e+37
          %v237 = vand.u32 %v225, 2147483648
          %v238 = vor.u32 1.1754944e-38, %v237
          %v239 = vsel %vm236, %v238, %v234
          %v240 = vmul.f32 %v224, %v239
          %241 = vst.msk [vmem:[#allocation4] sm:$0x1] %vm204, %v240
        $region36: #{tpu_custom_call.1} parent=27 // pred_fallthru
          _
        // Predicated region
        $region37: #{tpu_custom_call.1} parent=27 // pred_check
          %p242 = pneg %p79
        $region38: #{tpu_custom_call.1} parent=27 // pred_check_branch
          %244 = sbr.rel (%p242) target = $region40
        $region39: #{tpu_custom_call.1} parent=27 // pred_region
          %246 = vsyncadd [#allocation5], 0
          %s248 = sshll.u32 [#allocation4], 4
          %s249 = int_to_ptr.vmem [resolvable:$true] %s248
          %s250 = sshll.u32 %s2, 4
          %s251 = int_to_ptr.hbm [resolvable:$true] %s250
          %253 = dma.vmem_to_hbm [thread:$0]  %s249, 16, %s251, [#allocation5]
        $region40: #{tpu_custom_call.1} parent=27 // pred_fallthru
          _
        // Predicated region
        $region41: #{tpu_custom_call.1} parent=27 // pred_check
          %p254 = pneg %p79
        $region42: #{tpu_custom_call.1} parent=27 // pred_check_branch
          %256 = sbr.rel (%p254) target = $region44
        $region43: #{tpu_custom_call.1} parent=27 // pred_region
          %258 = dma.done [#allocation5], 16
        $region44: #{tpu_custom_call.1} parent=27 // pred_fallthru
          _
      $region28: #{tpu_custom_call.1} parent=5 // pred_fallthru
        _
      %p259 = scmp.le.s32.totalorder 2, %s9
      // Predicated region
      $region45: #{tpu_custom_call.1} parent=5 // pred_check
        %p260 = pneg %p259
      $region46: #{tpu_custom_call.1} parent=5 // pred_check_branch
        %262 = sbr.rel (%p260) target = $region48
      $region47: #{tpu_custom_call.1} parent=5 // pred_region
        %s263 = ssub.s32 %s9, 2
      $region48: #{tpu_custom_call.1} parent=5 // pred_fallthru
        _
    $region6: #{tpu_custom_call.1} parent=1 // loop_footer
      %s13 = sadd.s32 1, %s9
    $region7: #{tpu_custom_call.1} parent=1 // loop_footer_branch
      %8 = sbr.rel target = $region3
    $region8: #{tpu_custom_call.1} parent=1 // loop_exit
      _
    %264 = vsyncpa [#allocation5], 1
    %s265 = scalar_lea.sflag [#allocation5], 1
    %266 = vsyncpa %s265, 1

</llo_original>
